<compile_context>
chip_gen: v5e
topology: v5e:2x2
jax: 0.10.0
libtpu: 0.0.40
codegen_flags: <defaults>
</compile_context>

<pallas_src>
import math

import jax
import jax.numpy as jnp
from jax.experimental import pallas as pl
from jax.experimental.pallas import tpu as pltpu


def _kernel_bias(x_ref, w_ref, b_ref, o_ref):
    # x_ref: (TB, Kc)  w_ref: (Kc, Nc)  b_ref: (1, Nc)  o_ref: (TB, Nc)
    acc = jnp.dot(x_ref[...], w_ref[...], preferred_element_type=jnp.float32)
    acc = acc + b_ref[...].astype(jnp.float32)
    o_ref[...] = acc.astype(o_ref.dtype)


def _kernel_nobias(x_ref, w_ref, o_ref):
    acc = jnp.dot(x_ref[...], w_ref[...], preferred_element_type=jnp.float32)
    o_ref[...] = acc.astype(o_ref.dtype)


def _round_up(x, m):
    return -(-x // m) * m


def _sublane_pack(dtype):
    # Sub-32-bit dtypes pack along sublanes: 8 rows f32, 16 bf16, 32 int8.
    return 8 * max(1, 4 // jnp.dtype(dtype).itemsize)


def _vmem_caps():
    """(physical_vmem_bytes, tiling_budget_bytes), generation-aware."""
    try:
        cap = int(pltpu.get_tpu_info().vmem_capacity_bytes)
    except Exception:
        cap = 64 * 1024 * 1024  # conservative (v7x-sized) fallback
    cap = max(min(cap, 128 << 20), 32 << 20)  # sanity clamp
    budget = int(cap * 0.75)  # ~96 MiB on v5e/v6e (128 MiB), ~48 MiB on v7x (64 MiB)
    return cap, budget


def _choose_group_chunk(G, Cin, Cout, k_target=256):
    """Groups per chunk Gc: Gc*Cin ~ k_target (MXU-width contraction), Gc | G,
    and chunked x/out lane widths multiples of 128 (lane-dense HBM blocks)."""
    want = max(1, -(-k_target // Cin))
    if want >= G:
        return G
    for gc in range(want, G):
        if G % gc == 0 and (gc * Cin) % 128 == 0 and (gc * Cout) % 128 == 0:
            return gc
    # TODO(synk): for awkward G (no lane-dense divisor) pad the groups instead
    # of falling back to the full (quadratic-in-G) block-diagonal weight.
    return G


def _choose_tile_b(B, pack, per_row_bytes, resident_bytes, tile_b, budget):
    """Batch tile: multiple of `pack`, fits the VMEM budget, and keeps >= 2
    grid steps when B is non-trivial (so v7x's two TensorCores both get work)."""
    if B <= 2 * pack:
        return B  # single block == full dim (layout-legal even if B < pack)
    tb = max(pack, (int(tile_b) // pack) * pack)
    tb = min(tb, _round_up(-(-B // 2), pack))  # never collapse to one block
    while tb > pack and resident_bytes + tb * per_row_bytes > budget:
        tb = max(pack, ((tb // 2) // pack) * pack)
    return tb


def separate_linear(x, weight, bias=None, *, tile_b=1024):
    """x: (..., G, Cin); weight: (G, Cin, Cout); bias: (G, Cout) or None."""
    assert x.ndim > 2, "SeparateLinear requires input with ndim > 2"
    G, Cin, Cout = weight.shape
    assert x.shape[-2] == G and x.shape[-1] == Cin

    batch_dims = x.shape[:-2]
    B = int(math.prod(batch_dims))

    # Free reshape (collapses contiguous trailing dims): (..., G, Cin) -> (B, G*Cin)
    x2 = x.reshape(B, G * Cin)

    # --- group chunking: one block-diagonal matmul per chunk ------------------
    Gc = _choose_group_chunk(G, Cin, Cout)
    nchunks = G // Gc
    Kc, Nc = Gc * Cin, Gc * Cout

    # Block-diagonal weight (nchunks, Gc*Cin, Gc*Cout); built once per call
    # (zeros off the diagonal blocks; cheap vs. the matmul itself).
    eye = jnp.eye(Gc, dtype=weight.dtype)
    w4 = weight.reshape(nchunks, Gc, Cin, Cout)
    w_bd = jnp.einsum("cgio,gh->cgiho", w4, eye).reshape(nchunks, Kc, Nc)
    b3 = None if bias is None else bias.reshape(nchunks, 1, Nc)

    # --- tiling ----------------------------------------------------------------
    itemsize = jnp.dtype(x.dtype).itemsize
    pack = _sublane_pack(x.dtype)
    per_row_bytes = 2 * (Kc + Nc) * itemsize  # double-buffered x + out blocks
    resident_bytes = 2 * Kc * Nc * jnp.dtype(weight.dtype).itemsize
    if bias is not None:
        resident_bytes += 2 * Nc * jnp.dtype(bias.dtype).itemsize

    cap, budget = _vmem_caps()
    tb = _choose_tile_b(B, pack, per_row_bytes, resident_bytes, tile_b, budget)
    nb = pl.cdiv(B, tb)  # partial last block is masked on writeback (no pad/slice)

    need = resident_bytes + tb * per_row_bytes
    vmem_limit = int(min(max(need + (8 << 20), 32 << 20), cap))

    in_specs = [
        pl.BlockSpec((tb, Kc), lambda c, i: (i, c)),  # x tile, lane-dense
        # Weight chunk: constant across the inner (batch) axis -> fetched once
        # per chunk and VMEM-resident across all batch tiles.
        pl.BlockSpec((None, Kc, Nc), lambda c, i: (c, 0, 0)),
    ]
    args = [x2, w_bd]
    if bias is not None:
        in_specs.append(pl.BlockSpec((None, 1, Nc), lambda c, i: (c, 0, 0)))
        args.append(b3)
        kernel = _kernel_bias
    else:
        kernel = _kernel_nobias

    bytes_accessed = (
        x2.size * itemsize
        + w_bd.size * jnp.dtype(weight.dtype).itemsize
        + (0 if bias is None else bias.size * jnp.dtype(bias.dtype).itemsize)
        + B * G * Cout * itemsize
    )

    out = pl.pallas_call(
        kernel,
        out_shape=jax.ShapeDtypeStruct((B, G * Cout), x.dtype),
        grid_spec=pltpu.PrefetchScalarGridSpec(
            num_scalar_prefetch=0,
            grid=(nchunks, nb),  # chunk axis outermost -> weight fetched once/chunk
            in_specs=in_specs,
            out_specs=pl.BlockSpec((tb, Nc), lambda c, i: (i, c)),  # lane-dense store
        ),
        compiler_params=pltpu.CompilerParams(
            dimension_semantics=("parallel", "parallel"),
            vmem_limit_bytes=vmem_limit,
        ),
        cost_estimate=pl.CostEstimate(
            flops=2 * B * G * Cin * Gc * Cout,  # MXU work actually executed
            transcendentals=0,
            bytes_accessed=int(bytes_accessed),
        ),
    )(*args)

    return out.reshape(*batch_dims, G, Cout)


def init_params(key, groups, in_channels, out_channels, dtype=jnp.float32):
    """Deterministic init mimicking the module's reset_parameters bounds."""
    kw, kb = jax.random.split(key)
    # kaiming_uniform_(a=sqrt(5)) on a (G, Cin, Cout) tensor:
    # fan_in = Cin * Cout, bound = sqrt(6 / ((1 + 5) * fan_in)) = 1/sqrt(fan_in)
    w_bound = 1.0 / math.sqrt(in_channels * out_channels)
    weight = jax.random.uniform(
        kw, (groups, in_channels, out_channels), dtype, -w_bound, w_bound)
    # bias bound = 1/sqrt(fan_in) with fan_in = in_channels
    b_bound = 1.0 / math.sqrt(in_channels)
    bias = jax.random.uniform(kb, (groups, out_channels), dtype, -b_bound, b_bound)
    return weight, bias


def _reference(x, weight, bias):
    out = jnp.einsum("...gc,gco->...go", x, weight)
    if bias is not None:
        out = out + bias
    return out


if __name__ == "__main__":
    key = jax.random.PRNGKey(0)
    k_x, k_x2, k_p, k_p2 = jax.random.split(key, 4)

    groups, in_channels, out_channels = 8, 32, 32
    weight, bias = init_params(k_p, groups, in_channels, out_channels)

    # Small test: x (2, 4, G, Cin) -> B = 8, single chunk, one (8,256)x(256,256) dot.
    x = jax.random.normal(k_x, (2, 4, groups, in_channels), jnp.float32)
    out = jax.block_until_ready(separate_linear(x, weight, bias))
    ref = _reference(x, weight, bias)
    assert out.shape == (2, 4, groups, out_channels)
    assert jnp.allclose(out, ref, atol=1e-5, rtol=1e-5), "mismatch vs reference (bias)"

    # Multi-tile + ragged-tail test: B = 160, tile_b=64 -> grid (1, 3) with a
    # masked partial last batch block (no wrapper-side pad / slice anymore).
    x_big = jax.random.normal(k_x2, (4, 40, groups, in_channels), jnp.float32)
    out_big = jax.block_until_ready(separate_linear(x_big, weight, bias, tile_b=64))
    ref_big = _reference(x_big, weight, bias)
    assert out_big.shape == (4, 40, groups, out_channels)
    assert jnp.allclose(out_big, ref_big, atol=1e-5, rtol=1e-5), "mismatch (tiled)"

    # Multi-chunk test: G = 16 -> 2 group-chunks of 8 on grid axis 0.
    weight16, bias16 = init_params(k_p2, 16, in_channels, out_channels)
    x16 = jax.random.normal(k_x, (2, 4, 16, in_channels), jnp.float32)
    out16 = jax.block_until_ready(separate_linear(x16, weight16, bias16))
    assert out16.shape == (2, 4, 16, out_channels)
    assert jnp.allclose(out16, _reference(x16, weight16, bias16),
                        atol=1e-5, rtol=1e-5), "mismatch (multi-chunk)"

    # No-bias path.
    out_nb = jax.block_until_ready(separate_linear(x, weight, None))
    assert jnp.allclose(out_nb, _reference(x, weight, None), atol=1e-5, rtol=1e-5), \
        "mismatch vs reference (no bias)"

    print("KERNEL_OK")
</pallas_src>

<mosaic_0001>
module attributes {stable_mosaic.version = 11 : i64} {
  func.func @_kernel_bias(%arg0: i32, %arg1: i32, %arg2: memref<8x256xf32, #tpu.memory_space<vmem>>, %arg3: memref<1x256x256xf32, #tpu.memory_space<vmem>>, %arg4: memref<1x1x256xf32, #tpu.memory_space<vmem>>, %arg5: memref<8x256xf32, #tpu.memory_space<vmem>>) attributes {dimension_semantics = [#tpu.dimension_semantics<parallel>, #tpu.dimension_semantics<parallel>], iteration_bounds = array<i64: 1, 1>, scalar_prefetch = 0 : i64, scratch_operands = 0 : i64, tpu.core_type = #tpu.core_type<tc>, window_params = [{transform_indices = @transform_0, window_bounds = array<i64: 8, 256>}, {transform_indices = @transform_1, window_bounds = array<i64: 1, 256, 256>}, {transform_indices = @transform_2, window_bounds = array<i64: 1, 1, 256>}, {transform_indices = @transform_3, window_bounds = array<i64: 8, 256>}]} {
    %c0 = arith.constant 0 : index
    %c0_0 = arith.constant 0 : index
    %0 = vector.load %arg2[%c0, %c0_0] : memref<8x256xf32, #tpu.memory_space<vmem>>, vector<8x256xf32>
    %c0_1 = arith.constant 0 : index
    %c0_2 = arith.constant 0 : index
    %c0_3 = arith.constant 0 : index
    %1 = vector.load %arg3[%c0_1, %c0_2, %c0_3] : memref<1x256x256xf32, #tpu.memory_space<vmem>>, vector<1x256x256xf32>
    %2 = vector.shape_cast %1 : vector<1x256x256xf32> to vector<256x256xf32>
    %cst = arith.constant dense<0.000000e+00> : vector<8x256xf32>
    %3 = tpu.matmul %0, %2, %cst {dimension_numbers = #tpu.dot_dimension_numbers<[1], [0], [0], [1], [0, 0, 1, 1], [], []>} : vector<8x256xf32>, vector<256x256xf32>, vector<8x256xf32> -> vector<8x256xf32>
    %c0_4 = arith.constant 0 : index
    %c0_5 = arith.constant 0 : index
    %c0_6 = arith.constant 0 : index
    %4 = vector.load %arg4[%c0_4, %c0_5, %c0_6] : memref<1x1x256xf32, #tpu.memory_space<vmem>>, vector<1x1x256xf32>
    %5 = vector.shape_cast %4 : vector<1x1x256xf32> to vector<1x256xf32>
    %6 = vector.broadcast %5 : vector<1x256xf32> to vector<8x256xf32>
    %7 = arith.addf %3, %6 : vector<8x256xf32>
    %c0_7 = arith.constant 0 : index
    %c0_8 = arith.constant 0 : index
    %8 = vector.load %arg5[%c0_7, %c0_8] : memref<8x256xf32, #tpu.memory_space<vmem>>, vector<8x256xf32>
    tpu.vector_store %arg5[%c0_7, %c0_8], %7 {strides = array<i32>} : memref<8x256xf32, #tpu.memory_space<vmem>>, vector<8x256xf32>,
    return
  }
  func.func @transform_0(%arg0: i32, %arg1: i32) -> (i32, i32) {
    %c0_i32 = arith.constant 0 : i32
    return %arg1, %arg0 : i32, i32
  }
  func.func @transform_1(%arg0: i32, %arg1: i32) -> (i32, i32, i32) {
    %c0_i32 = arith.constant 0 : i32
    %c0_i32_0 = arith.constant 0 : i32
    %c0_i32_1 = arith.constant 0 : i32
    return %arg0, %c0_i32, %c0_i32_0 : i32, i32, i32
  }
  func.func @transform_2(%arg0: i32, %arg1: i32) -> (i32, i32, i32) {
    %c0_i32 = arith.constant 0 : i32
    %c0_i32_0 = arith.constant 0 : i32
    %c0_i32_1 = arith.constant 0 : i32
    return %arg0, %c0_i32, %c0_i32_0 : i32, i32, i32
  }
  func.func @transform_3(%arg0: i32, %arg1: i32) -> (i32, i32) {
    %c0_i32 = arith.constant 0 : i32
    return %arg1, %arg0 : i32, i32
  }
}

</mosaic_0001>

<llo_original>
// kernel: tpu_custom_call.1
$region0: #{tpu_custom_call.1}
  #allocation0 [shape = 'u32[]', space=smem, size = 0x4, offset = 0x4, fixed_abs, tag = 'smem constant byte address 0x4 - core index']
  #allocation1 [shape = 'u32[72,128]{1,0:T(1,128)}', space=vmem, size = 0x9000, scoped, tag = 'internal scratch']
  %s0 = inlined_call_operand.hbm [shape: f32[8,256], index: 0, kind: input, shape index: {}]
  %s1 = inlined_call_operand.hbm [shape: f32[1,256,256], index: 1, kind: input, shape index: {}]
  %s2 = inlined_call_operand.hbm [shape: f32[1,1,256], index: 2, kind: input, shape index: {}]
  %s3 = inlined_call_operand.hbm [shape: f32[8,256], index: 3, kind: output, shape index: {}]
  %s4 = sld [smem:[#allocation0]]
  $region34: #{tpu_custom_call.1} parent=0
    _
  %s6 = ssub.s32 1, %s4
  %s7 = scalar_select 0, %s6, %s4
  $region1: #{tpu_custom_call.1} parent=0
    #allocation2 [shape = 'u8[8192]{0}', space=vmem, size = 0x2000, scoped, tag = 'input window, operand 0, single buffered']
    #allocation3 [shape = 's32[1]{0}', space=sflag, size = 0x4, scoped, tag = 'scoped memory for tpu_custom_call.1']
    #allocation4 [shape = 's32[1]{0}', space=sflag, size = 0x4, scoped, tag = 'scoped memory for tpu_custom_call.1']
    #allocation5 [shape = 'u8[262144]{0}', space=vmem, size = 0x40000, scoped, tag = 'input window, operand 1, single buffered']
    #allocation6 [shape = 's32[1]{0}', space=sflag, size = 0x4, scoped, tag = 'scoped memory for tpu_custom_call.1']
    #allocation7 [shape = 'u8[1024]{0}', space=vmem, size = 0x400, scoped, tag = 'input window, operand 2, single buffered']
    #allocation8 [shape = 'u8[8192]{0}', space=vmem, size = 0x2000, scoped, tag = 'output window, operand 0, single buffered']
    %8 = vsyncpa [#allocation3], 0
    %9 = vsyncpa [#allocation6], 0
    %10 = vsyncpa [#allocation4], 0
    // Predicated region
    $region2: #{tpu_custom_call.1} parent=1 // pred_check
      _
    $region3: #{tpu_custom_call.1} parent=1 // pred_check_branch
      %12 = sbr.rel (0) target = $region5
    $region4: #{tpu_custom_call.1} parent=1 // pred_region
      %14 = vsyncadd [#allocation3], 0
      %s16 = sshll.u32 %s0, 4
      %s17 = int_to_ptr.hbm [resolvable:$true] %s16
      %s18 = sshll.u32 [#allocation2], 4
      %s19 = int_to_ptr.vmem [resolvable:$true] %s18
      %21 = dma.hbm_to_vmem [thread:$0]  %s17, 256, %s19, [#allocation3]
    $region5: #{tpu_custom_call.1} parent=1 // pred_fallthru
      _
    // Predicated region
    $region6: #{tpu_custom_call.1} parent=1 // pred_check
      _
    $region7: #{tpu_custom_call.1} parent=1 // pred_check_branch
      %23 = sbr.rel (0) target = $region9
    $region8: #{tpu_custom_call.1} parent=1 // pred_region
      %25 = vsyncadd [#allocation6], 0
      %s26 = sshll.u32 %s1, 4
      %s27 = int_to_ptr.hbm [resolvable:$true] %s26
      %s28 = sshll.u32 [#allocation5], 4
      %s29 = int_to_ptr.vmem [resolvable:$true] %s28
      %34 = dma.hbm_to_vmem [thread:$0]  %s27, 8192, %s29, [#allocation6], 256, 256, 16
    $region9: #{tpu_custom_call.1} parent=1 // pred_fallthru
      _
    // Predicated region
    $region10: #{tpu_custom_call.1} parent=1 // pred_check
      _
    $region11: #{tpu_custom_call.1} parent=1 // pred_check_branch
      %36 = sbr.rel (0) target = $region13
    $region12: #{tpu_custom_call.1} parent=1 // pred_region
      %38 = vsyncadd [#allocation6], 0
      %s40 = sshll.u32 %s2, 4
      %s41 = int_to_ptr.hbm [resolvable:$true] %s40
      %s42 = sshll.u32 [#allocation7], 4
      %s43 = int_to_ptr.vmem [resolvable:$true] %s42
      %45 = dma.hbm_to_vmem [thread:$0]  %s41, 32, %s43, [#allocation6]
    $region13: #{tpu_custom_call.1} parent=1 // pred_fallthru
      _
    // Predicated region
    $region14: #{tpu_custom_call.1} parent=1 // pred_check
      _
    $region15: #{tpu_custom_call.1} parent=1 // pred_check_branch
      %47 = sbr.rel (0) target = $region17
    $region16: #{tpu_custom_call.1} parent=1 // pred_region
      %49 = dma.done [#allocation3], 256
    $region17: #{tpu_custom_call.1} parent=1 // pred_fallthru
      _
    // Predicated region
    $region18: #{tpu_custom_call.1} parent=1 // pred_check
      _
    $region19: #{tpu_custom_call.1} parent=1 // pred_check_branch
      %51 = sbr.rel (0) target = $region21
    $region20: #{tpu_custom_call.1} parent=1 // pred_region
      %53 = dma.done [#allocation6], 8192
    $region21: #{tpu_custom_call.1} parent=1 // pred_fallthru
      _
    // Predicated region
    $region22: #{tpu_custom_call.1} parent=1 // pred_check
      _
    $region23: #{tpu_custom_call.1} parent=1 // pred_check_branch
      %55 = sbr.rel (0) target = $region25
    $region24: #{tpu_custom_call.1} parent=1 // pred_region
      %57 = dma.done [#allocation6], 32
    $region25: #{tpu_custom_call.1} parent=1 // pred_fallthru
      _
    %v58 = vld [vmem:[#allocation2] sm:$0xff]
    %v59 = vld [vmem:[#allocation2 + $0x8] sm:$0xff]
    %v60 = vld [vmem:[#allocation5] sm:$0xff]
    %v61 = vld [vmem:[#allocation5 + $0x8] sm:$0xff]
    %v62 = vld [vmem:[#allocation5 + $0x10] sm:$0xff]
    %v63 = vld [vmem:[#allocation5 + $0x18] sm:$0xff]
    %v64 = vld [vmem:[#allocation5 + $0x20] sm:$0xff]
    %v65 = vld [vmem:[#allocation5 + $0x28] sm:$0xff]
    %v66 = vld [vmem:[#allocation5 + $0x30] sm:$0xff]
    %v67 = vld [vmem:[#allocation5 + $0x38] sm:$0xff]
    %v68 = vld [vmem:[#allocation5 + $0x40] sm:$0xff]
    %v69 = vld [vmem:[#allocation5 + $0x48] sm:$0xff]
    %v70 = vld [vmem:[#allocation5 + $0x50] sm:$0xff]
    %v71 = vld [vmem:[#allocation5 + $0x58] sm:$0xff]
    %v72 = vld [vmem:[#allocation5 + $0x60] sm:$0xff]
    %v73 = vld [vmem:[#allocation5 + $0x68] sm:$0xff]
    %v74 = vld [vmem:[#allocation5 + $0x70] sm:$0xff]
    %v75 = vld [vmem:[#allocation5 + $0x78] sm:$0xff]
    %v76 = vld [vmem:[#allocation5 + $0x80] sm:$0xff]
    %v77 = vld [vmem:[#allocation5 + $0x88] sm:$0xff]
    %v78 = vld [vmem:[#allocation5 + $0x90] sm:$0xff]
    %v79 = vld [vmem:[#allocation5 + $0x98] sm:$0xff]
    %v80 = vld [vmem:[#allocation5 + $0xa0] sm:$0xff]
    %v81 = vld [vmem:[#allocation5 + $0xa8] sm:$0xff]
    %v82 = vld [vmem:[#allocation5 + $0xb0] sm:$0xff]
    %v83 = vld [vmem:[#allocation5 + $0xb8] sm:$0xff]
    %v84 = vld [vmem:[#allocation5 + $0xc0] sm:$0xff]
    %v85 = vld [vmem:[#allocation5 + $0xc8] sm:$0xff]
    %v86 = vld [vmem:[#allocation5 + $0xd0] sm:$0xff]
    %v87 = vld [vmem:[#allocation5 + $0xd8] sm:$0xff]
    %v88 = vld [vmem:[#allocation5 + $0xe0] sm:$0xff]
    %v89 = vld [vmem:[#allocation5 + $0xe8] sm:$0xff]
    %v90 = vld [vmem:[#allocation5 + $0xf0] sm:$0xff]
    %v91 = vld [vmem:[#allocation5 + $0xf8] sm:$0xff]
    %v92 = vld [vmem:[#allocation5 + $0x100] sm:$0xff]
    %v93 = vld [vmem:[#allocation5 + $0x108] sm:$0xff]
    %v94 = vld [vmem:[#allocation5 + $0x110] sm:$0xff]
    %v95 = vld [vmem:[#allocation5 + $0x118] sm:$0xff]
    %v96 = vld [vmem:[#allocation5 + $0x120] sm:$0xff]
    %v97 = vld [vmem:[#allocation5 + $0x128] sm:$0xff]
    %v98 = vld [vmem:[#allocation5 + $0x130] sm:$0xff]
    %v99 = vld [vmem:[#allocation5 + $0x138] sm:$0xff]
    %v100 = vld [vmem:[#allocation5 + $0x140] sm:$0xff]
    %v101 = vld [vmem:[#allocation5 + $0x148] sm:$0xff]
    %v102 = vld [vmem:[#allocation5 + $0x150] sm:$0xff]
    %v103 = vld [vmem:[#allocation5 + $0x158] sm:$0xff]
    %v104 = vld [vmem:[#allocation5 + $0x160] sm:$0xff]
    %v105 = vld [vmem:[#allocation5 + $0x168] sm:$0xff]
    %v106 = vld [vmem:[#allocation5 + $0x170] sm:$0xff]
    %v107 = vld [vmem:[#allocation5 + $0x178] sm:$0xff]
    %v108 = vld [vmem:[#allocation5 + $0x180] sm:$0xff]
    %v109 = vld [vmem:[#allocation5 + $0x188] sm:$0xff]
    %v110 = vld [vmem:[#allocation5 + $0x190] sm:$0xff]
    %v111 = vld [vmem:[#allocation5 + $0x198] sm:$0xff]
    %v112 = vld [vmem:[#allocation5 + $0x1a0] sm:$0xff]
    %v113 = vld [vmem:[#allocation5 + $0x1a8] sm:$0xff]
    %v114 = vld [vmem:[#allocation5 + $0x1b0] sm:$0xff]
    %v115 = vld [vmem:[#allocation5 + $0x1b8] sm:$0xff]
    %v116 = vld [vmem:[#allocation5 + $0x1c0] sm:$0xff]
    %v117 = vld [vmem:[#allocation5 + $0x1c8] sm:$0xff]
    %v118 = vld [vmem:[#allocation5 + $0x1d0] sm:$0xff]
    %v119 = vld [vmem:[#allocation5 + $0x1d8] sm:$0xff]
    %v120 = vld [vmem:[#allocation5 + $0x1e0] sm:$0xff]
    %v121 = vld [vmem:[#allocation5 + $0x1e8] sm:$0xff]
    %v122 = vld [vmem:[#allocation5 + $0x1f0] sm:$0xff]
    %v123 = vld [vmem:[#allocation5 + $0x1f8] sm:$0xff]
    %v124 = vld [vmem:[#allocation7] sm:$0x3]
    %v126 = vperm.slane %v124, 0
    %v127 = vperm.slane %v124, 1
    %130 = vmatpush.msra.mxu0 %v90
    %131 = vmatpush.msra.mxu0 %v88
    %132 = vmatpush.msra.mxu0 %v86
    %133 = vmatpush.msra.mxu0 %v84
    %134 = vmatpush.msra.mxu0 %v82
    %135 = vmatpush.msra.mxu0 %v80
    %136 = vmatpush.msra.mxu0 %v78
    %137 = vmatpush.msra.mxu0 %v76
    %138 = vmatpush.msra.mxu0 %v74
    %139 = vmatpush.msra.mxu0 %v72
    %140 = vmatpush.msra.mxu0 %v70
    %141 = vmatpush.msra.mxu0 %v68
    %142 = vmatpush.msra.mxu0 %v66
    %143 = vmatpush.msra.mxu0 %v64
    %144 = vmatpush.msra.mxu0 %v62
    %145 = vmatpush.msra.mxu0 %v60
    %146 = vmatmul.f32.gmra.mxu0 %v58
    %v147 = vpop.f32.mrf.mxu0
    %v148 = vadd.f32 %v126, %v147
    %149 = vdwg.mxu0
    %150 = vmatpush.msra.mxu0 %v122
    %151 = vmatpush.msra.mxu0 %v120
    %152 = vmatpush.msra.mxu0 %v118
    %153 = vmatpush.msra.mxu0 %v116
    %154 = vmatpush.msra.mxu0 %v114
    %155 = vmatpush.msra.mxu0 %v112
    %156 = vmatpush.msra.mxu0 %v110
    %157 = vmatpush.msra.mxu0 %v108
    %158 = vmatpush.msra.mxu0 %v106
    %159 = vmatpush.msra.mxu0 %v104
    %160 = vmatpush.msra.mxu0 %v102
    %161 = vmatpush.msra.mxu0 %v100
    %162 = vmatpush.msra.mxu0 %v98
    %163 = vmatpush.msra.mxu0 %v96
    %164 = vmatpush.msra.mxu0 %v94
    %165 = vmatpush.msra.mxu0 %v92
    %166 = vmatmul.f32.gmra.mxu0 %v59
    %v167 = vpop.f32.mrf.mxu0
    %v168 = vadd.f32 %v148, %v167
    %169 = vdwg.mxu0
    %170 = vmatpush.msra.mxu0 %v91
    %171 = vmatpush.msra.mxu0 %v89
    %172 = vmatpush.msra.mxu0 %v87
    %173 = vmatpush.msra.mxu0 %v85
    %174 = vmatpush.msra.mxu0 %v83
    %175 = vmatpush.msra.mxu0 %v81
    %176 = vmatpush.msra.mxu0 %v79
    %177 = vmatpush.msra.mxu0 %v77
    %178 = vmatpush.msra.mxu0 %v75
    %179 = vmatpush.msra.mxu0 %v73
    %180 = vmatpush.msra.mxu0 %v71
    %181 = vmatpush.msra.mxu0 %v69
    %182 = vmatpush.msra.mxu0 %v67
    %183 = vmatpush.msra.mxu0 %v65
    %184 = vmatpush.msra.mxu0 %v63
    %185 = vmatpush.msra.mxu0 %v61
    %186 = vmatmul.f32.gmra.mxu0 %v58
    %v187 = vpop.f32.mrf.mxu0
    %v188 = vadd.f32 %v127, %v187
    %189 = vdwg.mxu0
    %190 = vmatpush.msra.mxu0 %v123
    %191 = vmatpush.msra.mxu0 %v121
    %192 = vmatpush.msra.mxu0 %v119
    %193 = vmatpush.msra.mxu0 %v117
    %194 = vmatpush.msra.mxu0 %v115
    %195 = vmatpush.msra.mxu0 %v113
    %196 = vmatpush.msra.mxu0 %v111
    %197 = vmatpush.msra.mxu0 %v109
    %198 = vmatpush.msra.mxu0 %v107
    %199 = vmatpush.msra.mxu0 %v105
    %200 = vmatpush.msra.mxu0 %v103
    %201 = vmatpush.msra.mxu0 %v101
    %202 = vmatpush.msra.mxu0 %v99
    %203 = vmatpush.msra.mxu0 %v97
    %204 = vmatpush.msra.mxu0 %v95
    %205 = vmatpush.msra.mxu0 %v93
    %206 = vmatmul.f32.gmra.mxu0 %v59
    %v207 = vpop.f32.mrf.mxu0
    %v208 = vadd.f32 %v188, %v207
    %209 = vdwg.mxu0
    %210 = vst [vmem:[#allocation8] sm:$0xff] %v168
    %211 = vst [vmem:[#allocation8 + $0x8] sm:$0xff] %v208
    // Predicated region
    $region26: #{tpu_custom_call.1} parent=1 // pred_check
      _
    $region27: #{tpu_custom_call.1} parent=1 // pred_check_branch
      %213 = sbr.rel (0) target = $region29
    $region28: #{tpu_custom_call.1} parent=1 // pred_region
      %215 = vsyncadd [#allocation4], 0
      %s217 = sshll.u32 [#allocation8], 4
      %s218 = int_to_ptr.vmem [resolvable:$true] %s217
      %s219 = sshll.u32 %s3, 4
      %s220 = int_to_ptr.hbm [resolvable:$true] %s219
      %222 = dma.vmem_to_hbm [thread:$0]  %s218, 256, %s220, [#allocation4]
    $region29: #{tpu_custom_call.1} parent=1 // pred_fallthru
      _
    // Predicated region
    $region30: #{tpu_custom_call.1} parent=1 // pred_check
      _
    $region31: #{tpu_custom_call.1} parent=1 // pred_check_branch
      %224 = sbr.rel (0) target = $region33
    $region32: #{tpu_custom_call.1} parent=1 // pred_region
      %226 = dma.done [#allocation4], 256
    $region33: #{tpu_custom_call.1} parent=1 // pred_fallthru
      _
    %227 = vsyncpa [#allocation3], 1
    %228 = vsyncpa [#allocation6], 1
    %229 = vsyncpa [#allocation4], 1

</llo_original>
